<compile_context>
chip_gen: v5e
topology: v5e:2x2
jax: 0.10.0
libtpu: 0.0.40
codegen_flags: <defaults>
</compile_context>

<pallas_src>
import math

import jax
import jax.numpy as jnp
from jax import lax
from jax.experimental import pallas as pl
from jax.experimental.pallas import tpu as pltpu


def _rup(v, m):
    return ((v + m - 1) // m) * m


def _chunks_desc(total):
    """Multiples of 128 that divide `total` (a multiple of 128), descending."""
    m = total // 128
    return [128 * d for d in range(m, 0, -1) if m % d == 0]


def _vmem_capacity_bytes():
    try:
        info = pltpu.get_tpu_info()
        cap = getattr(info, "vmem_capacity_bytes", None)
        if cap:
            return int(cap)
    except Exception:
        pass
    return 64 * 1024 * 1024  # conservative fallback (v7x per-TC VMEM)


def _make_ffn_kernel(use_scratch, approximate_gelu):
    inv_sqrt2 = 1.0 / math.sqrt(2.0)

    def kernel(x_ref, w1_ref, b1_ref, w2_ref, b2_ref, o_ref, *scratch):
        # x_ref:  (tm, D_pad)   token tile (resident across j, k)
        # w1_ref: (D_pad, th)   first-linear weight chunk (hidden-tiled)
        # b1_ref: (1, th)       first-linear bias chunk
        # w2_ref: (th, td)      second-linear weight chunk
        # b2_ref: (1, td)       second-linear bias chunk (added exactly once, in finalize)
        # o_ref:  (tm, td)      output tile (resident across k)
        # scratch: optional (tm, td) f32 accumulator (only when o_ref dtype is not f32)
        acc_ref = scratch[0] if use_scratch else o_ref
        k = pl.program_id(2)

        @pl.when(k == 0)
        def _():
            acc_ref[...] = jnp.zeros_like(acc_ref)

        # First linear chunk: (tm, D_pad) @ (D_pad, th), f32 accumulation on the MXU.
        h = jnp.dot(x_ref[...], w1_ref[...], preferred_element_type=jnp.float32)
        h = h + b1_ref[...].astype(jnp.float32)

        if approximate_gelu:
            # tanh-approximate GELU: transcendental goes to the EUP slot (useful when the
            # erf polynomial would saturate the VALU on v5e small-D configs).
            h = jax.nn.gelu(h, approximate=True)
        else:
            # Exact erf GELU (matches torch.nn.GELU() default). GELU(0) == 0, so padded
            # hidden lanes contribute nothing.
            h = 0.5 * h * (1.0 + lax.erf(h * inv_sqrt2))

        # Second linear partial sum, accumulated in f32 (directly in o_ref when f32).
        acc_ref[...] += jnp.dot(h.astype(w2_ref.dtype), w2_ref[...],
                                preferred_element_type=jnp.float32)

        @pl.when(k == pl.num_programs(2) - 1)
        def _():
            o_ref[...] = (acc_ref[...] + b2_ref[...].astype(jnp.float32)).astype(o_ref.dtype)

    return kernel


def _select_tiles(T, D_pad, H_pad, in_item, out_item, budget, use_scratch):
    """Pick (tm, th, td). Prefers (a) fully VMEM-resident weights, then (b) large token
    tiles for arithmetic intensity, then (c) output-D tiling for very large dim."""
    T8 = _rup(max(int(T), 1), 8)

    def ws(tm, th, td):
        b = 2 * tm * D_pad * in_item      # x (double-buffered across token tiles)
        b += 2 * D_pad * th * in_item     # w1
        b += 2 * th * td * in_item        # w2
        b += 2 * 8 * th * 4               # b1 (sublane-padded, f32)
        b += 2 * 8 * td * 4               # b2
        b += 2 * tm * td * out_item       # output tile
        if use_scratch:
            b += tm * td * 4              # f32 accumulator
        return b

    def tm_candidates():
        cands = [1024, 768, 512, 384, 256, 192, 128, 96, 64, 48, 32, 24, 16, 8]
        out = []
        for c in cands:
            if c > T8:
                continue
            n_tiles = _rup(T8, c) // c
            # Keep >= 2 token tiles when possible so both v7x TensorCores get work.
            if T8 >= 16 and n_tiles < 2 and c > 8:
                continue
            out.append(c)
        return out or [8]

    tms = tm_candidates()
    ths = _chunks_desc(H_pad)
    tds = _chunks_desc(D_pad)

    # Phase 1: weights fully VMEM-resident -> w1/w2 DMA'd exactly once for the whole grid.
    for tm in tms:
        if ws(tm, H_pad, D_pad) <= budget:
            return tm, H_pad, D_pad

    # Phase 2: stream hidden chunks; maximize tm (weight-traffic intensity ~ tm).
    for tm in tms:
        for th in ths:
            if ws(tm, th, D_pad) <= budget:
                return tm, th, D_pad

    # Phase 3: very large dim -- also tile the output feature dim (parallel grid axis).
    for tm in tms:
        for td in tds:
            for th in ths:
                if ws(tm, th, td) <= budget:
                    return tm, th, td

    # Fallback: smallest everything.
    return tms[-1], 128, 128


def _pad_cast_2d(a, rows, cols, dtype):
    r, c = a.shape
    if (r, c) == (rows, cols) and a.dtype == dtype:
        return a                      # already aligned: no extra HBM copy
    if (r, c) == (rows, cols):
        return a.astype(dtype)
    out = jnp.zeros((rows, cols), dtype)
    return out.at[:r, :c].set(a.astype(dtype))


def feed_forward(x, w1, b1, w2, b2, *, compute_dtype=None, tiles=None,
                 approximate_gelu=False):
    """Fused Linear -> GELU -> Linear (dropout is identity at p=0.0).

    x: (B, N, dim); w1: (dim, hidden); b1: (hidden,); w2: (hidden, dim); b2: (dim,).
    compute_dtype: optional MXU operand dtype (e.g. jnp.bfloat16); accumulation stays f32
        and the output keeps x.dtype.
    tiles: optional (tm, th, td) override of the auto-selected tiling.
    """
    B, N, dim = x.shape
    hidden = w1.shape[1]
    T = B * N

    out_dtype = x.dtype
    cdt = jnp.dtype(compute_dtype) if compute_dtype is not None else jnp.dtype(x.dtype)

    D_pad = _rup(dim, 128)
    H_pad = _rup(hidden, 128)

    # Generation-aware VMEM budget: ~80% of physical VMEM as the Mosaic limit
    # (~102 MiB on v5e/v6e, ~51 MiB on v7x); tile against ~85% of that for headroom.
    vmem_limit = int(_vmem_capacity_bytes() * 0.8)
    budget = int(vmem_limit * 0.85)

    use_scratch = jnp.dtype(out_dtype) != jnp.dtype(jnp.float32)

    if tiles is not None:
        tm, th, td = tiles
    else:
        tm, th, td = _select_tiles(T, D_pad, H_pad, cdt.itemsize,
                                   jnp.dtype(out_dtype).itemsize, budget, use_scratch)
    tm = max(8, _rup(min(tm, _rup(T, 8)), 8))
    T_pad = _rup(T, tm)

    # Host-side padding / casting only when actually needed. Zero padding preserves the
    # math exactly: padded x rows are sliced off, padded hidden lanes see b1=0 so
    # GELU(0)=0, padded output lanes get 0 + b2_pad(0).
    x2d = _pad_cast_2d(x.reshape(T, dim), T_pad, D_pad, cdt)
    w1p = _pad_cast_2d(w1, D_pad, H_pad, cdt)
    w2p = _pad_cast_2d(w2, H_pad, D_pad, cdt)
    b1p = _pad_cast_2d(b1.reshape(1, hidden), 1, H_pad, b1.dtype)
    b2p = _pad_cast_2d(b2.reshape(1, dim), 1, D_pad, b2.dtype)

    grid = (T_pad // tm, D_pad // td, H_pad // th)  # tokens x out-D x hidden (reduction)

    kernel = _make_ffn_kernel(use_scratch, approximate_gelu)
    scratch_shapes = [pltpu.VMEM((tm, td), jnp.float32)] if use_scratch else []

    out2d = pl.pallas_call(
        kernel,
        out_shape=jax.ShapeDtypeStruct((T_pad, D_pad), out_dtype),
        grid_spec=pltpu.PrefetchScalarGridSpec(
            num_scalar_prefetch=0,
            grid=grid,
            in_specs=[
                pl.BlockSpec((tm, D_pad), lambda i, j, k: (i, 0)),   # x tile (resident over j,k)
                pl.BlockSpec((D_pad, th), lambda i, j, k: (0, k)),   # w1 hidden chunk
                pl.BlockSpec((1, th), lambda i, j, k: (0, k)),       # b1 hidden chunk
                pl.BlockSpec((th, td), lambda i, j, k: (k, j)),      # w2 chunk
                pl.BlockSpec((1, td), lambda i, j, k: (0, j)),       # b2 chunk
            ],
            out_specs=pl.BlockSpec((tm, td), lambda i, j, k: (i, j)),
            scratch_shapes=scratch_shapes,
        ),
        compiler_params=pltpu.CompilerParams(
            dimension_semantics=("parallel", "parallel", "arbitrary"),
            vmem_limit_bytes=vmem_limit,
        ),
    )(x2d, w1p, b1p, w2p, b2p)

    return out2d[:T, :dim].reshape(B, N, dim)


def feed_forward_ref(x, w1, b1, w2, b2):
    h = jnp.einsum("bnd,dh->bnh", x, w1) + b1
    h = 0.5 * h * (1.0 + lax.erf(h / jnp.sqrt(2.0)))
    return jnp.einsum("bnh,hd->bnd", h, w2) + b2


if __name__ == "__main__":
    # Small shapes consistent with the module: tokens of width `dim`, hidden expansion.
    B, N, dim, hidden = 2, 8, 32, 64

    key = jax.random.PRNGKey(0)
    kx, kw1, kb1, kw2, kb2 = jax.random.split(key, 5)

    x = jax.random.normal(kx, (B, N, dim), dtype=jnp.float32)

    # Deterministic parameter init (mimics nn.Linear's uniform(-1/sqrt(fan_in), 1/sqrt(fan_in)))
    lim1 = 1.0 / math.sqrt(dim)
    lim2 = 1.0 / math.sqrt(hidden)
    w1 = jax.random.uniform(kw1, (dim, hidden), jnp.float32, -lim1, lim1)
    b1 = jax.random.uniform(kb1, (hidden,), jnp.float32, -lim1, lim1)
    w2 = jax.random.uniform(kw2, (hidden, dim), jnp.float32, -lim2, lim2)
    b2 = jax.random.uniform(kb2, (dim,), jnp.float32, -lim2, lim2)

    ref = feed_forward_ref(x, w1, b1, w2, b2)

    # Default path: native-f32 operands, exact-erf GELU -> tight tolerance.
    out = jax.block_until_ready(feed_forward(x, w1, b1, w2, b2))
    assert out.shape == (B, N, dim)
    assert jnp.allclose(out, ref, atol=1e-5, rtol=1e-5), "f32 kernel mismatch vs reference"

    # bf16 MXU operand path (f32 accumulation, f32 output) -> looser tolerance.
    out_bf16 = jax.block_until_ready(
        feed_forward(x, w1, b1, w2, b2, compute_dtype=jnp.bfloat16))
    assert jnp.allclose(out_bf16, ref, atol=8e-2, rtol=8e-2), "bf16 kernel mismatch vs reference"

    print("KERNEL_OK")
</pallas_src>

<mosaic_0001>
module attributes {stable_mosaic.version = 11 : i64} {
  func.func @kernel(%arg0: i32, %arg1: i32, %arg2: i32, %arg3: memref<8x128xf32, #tpu.memory_space<vmem>>, %arg4: memref<128x128xf32, #tpu.memory_space<vmem>>, %arg5: memref<1x128xf32, #tpu.memory_space<vmem>>, %arg6: memref<128x128xf32, #tpu.memory_space<vmem>>, %arg7: memref<1x128xf32, #tpu.memory_space<vmem>>, %arg8: memref<8x128xf32, #tpu.memory_space<vmem>>) attributes {dimension_semantics = [#tpu.dimension_semantics<parallel>, #tpu.dimension_semantics<parallel>, #tpu.dimension_semantics<arbitrary>], iteration_bounds = array<i64: 2, 1, 1>, scalar_prefetch = 0 : i64, scratch_operands = 0 : i64, tpu.core_type = #tpu.core_type<tc>, window_params = [{transform_indices = @transform_0, window_bounds = array<i64: 8, 128>}, {transform_indices = @transform_1, window_bounds = array<i64: 128, 128>}, {transform_indices = @transform_2, window_bounds = array<i64: 1, 128>}, {transform_indices = @transform_3, window_bounds = array<i64: 128, 128>}, {transform_indices = @transform_4, window_bounds = array<i64: 1, 128>}, {transform_indices = @transform_5, window_bounds = array<i64: 8, 128>}]} {
    %c0_i32 = arith.constant 0 : i32
    %0 = arith.cmpi eq, %arg2, %c0_i32 : i32
    %1 = arith.extui %0 : i1 to i32
    %c0_i32_0 = arith.constant 0 : i32
    %2 = arith.cmpi ne, %1, %c0_i32_0 : i32
    scf.if %2 {
      %cst_18 = arith.constant 0.000000e+00 : f32
      %25 = vector.broadcast %cst_18 : f32 to vector<8x128xf32>
      %c0_19 = arith.constant 0 : index
      %c0_20 = arith.constant 0 : index
      %26 = vector.load %arg8[%c0_19, %c0_20] : memref<8x128xf32, #tpu.memory_space<vmem>>, vector<8x128xf32>
      tpu.vector_store %arg8[%c0_19, %c0_20], %25 {strides = array<i32>} : memref<8x128xf32, #tpu.memory_space<vmem>>, vector<8x128xf32>,
    } else {
    }
    %c0 = arith.constant 0 : index
    %c0_1 = arith.constant 0 : index
    %3 = vector.load %arg3[%c0, %c0_1] : memref<8x128xf32, #tpu.memory_space<vmem>>, vector<8x128xf32>
    %c0_2 = arith.constant 0 : index
    %c0_3 = arith.constant 0 : index
    %4 = vector.load %arg4[%c0_2, %c0_3] : memref<128x128xf32, #tpu.memory_space<vmem>>, vector<128x128xf32>
    %cst = arith.constant dense<0.000000e+00> : vector<8x128xf32>
    %5 = tpu.matmul %3, %4, %cst {dimension_numbers = #tpu.dot_dimension_numbers<[1], [0], [0], [1], [0, 0, 1, 1], [], []>} : vector<8x128xf32>, vector<128x128xf32>, vector<8x128xf32> -> vector<8x128xf32>
    %c0_4 = arith.constant 0 : index
    %c0_5 = arith.constant 0 : index
    %6 = vector.load %arg5[%c0_4, %c0_5] : memref<1x128xf32, #tpu.memory_space<vmem>>, vector<1x128xf32>
    %7 = vector.broadcast %6 : vector<1x128xf32> to vector<8x128xf32>
    %8 = arith.addf %5, %7 : vector<8x128xf32>
    %cst_6 = arith.constant 5.000000e-01 : f32
    %9 = vector.broadcast %cst_6 : f32 to vector<8x128xf32>
    %10 = arith.mulf %9, %8 : vector<8x128xf32>
    %cst_7 = arith.constant 0.707106769 : f32
    %11 = vector.broadcast %cst_7 : f32 to vector<8x128xf32>
    %12 = arith.mulf %8, %11 : vector<8x128xf32>
    %13 = math.erf %12 : vector<8x128xf32>
    %cst_8 = arith.constant 1.000000e+00 : f32
    %14 = vector.broadcast %cst_8 : f32 to vector<8x128xf32>
    %15 = arith.addf %14, %13 : vector<8x128xf32>
    %16 = arith.mulf %10, %15 : vector<8x128xf32>
    %c0_9 = arith.constant 0 : index
    %c0_10 = arith.constant 0 : index
    %17 = vector.load %arg8[%c0_9, %c0_10] : memref<8x128xf32, #tpu.memory_space<vmem>>, vector<8x128xf32>
    %c0_11 = arith.constant 0 : index
    %c0_12 = arith.constant 0 : index
    %18 = vector.load %arg6[%c0_11, %c0_12] : memref<128x128xf32, #tpu.memory_space<vmem>>, vector<128x128xf32>
    %cst_13 = arith.constant dense<0.000000e+00> : vector<8x128xf32>
    %19 = tpu.matmul %16, %18, %cst_13 {dimension_numbers = #tpu.dot_dimension_numbers<[1], [0], [0], [1], [0, 0, 1, 1], [], []>} : vector<8x128xf32>, vector<128x128xf32>, vector<8x128xf32> -> vector<8x128xf32>
    %20 = arith.addf %17, %19 : vector<8x128xf32>
    %c0_14 = arith.constant 0 : index
    %c0_15 = arith.constant 0 : index
    %21 = vector.load %arg8[%c0_14, %c0_15] : memref<8x128xf32, #tpu.memory_space<vmem>>, vector<8x128xf32>
    tpu.vector_store %arg8[%c0_14, %c0_15], %20 {strides = array<i32>} : memref<8x128xf32, #tpu.memory_space<vmem>>, vector<8x128xf32>,
    %c0_i32_16 = arith.constant 0 : i32
    %22 = arith.cmpi eq, %arg2, %c0_i32_16 : i32
    %23 = arith.extui %22 : i1 to i32
    %c0_i32_17 = arith.constant 0 : i32
    %24 = arith.cmpi ne, %23, %c0_i32_17 : i32
    scf.if %24 {
      %c0_18 = arith.constant 0 : index
      %c0_19 = arith.constant 0 : index
      %25 = vector.load %arg8[%c0_18, %c0_19] : memref<8x128xf32, #tpu.memory_space<vmem>>, vector<8x128xf32>
      %c0_20 = arith.constant 0 : index
      %c0_21 = arith.constant 0 : index
      %26 = vector.load %arg7[%c0_20, %c0_21] : memref<1x128xf32, #tpu.memory_space<vmem>>, vector<1x128xf32>
      %27 = vector.broadcast %26 : vector<1x128xf32> to vector<8x128xf32>
      %28 = arith.addf %25, %27 : vector<8x128xf32>
      %c0_22 = arith.constant 0 : index
      %c0_23 = arith.constant 0 : index
      %29 = vector.load %arg8[%c0_22, %c0_23] : memref<8x128xf32, #tpu.memory_space<vmem>>, vector<8x128xf32>
      tpu.vector_store %arg8[%c0_22, %c0_23], %28 {strides = array<i32>} : memref<8x128xf32, #tpu.memory_space<vmem>>, vector<8x128xf32>,
    } else {
    }
    return
  }
  func.func @transform_0(%arg0: i32, %arg1: i32, %arg2: i32) -> (i32, i32) {
    %c0_i32 = arith.constant 0 : i32
    %c0_i32_0 = arith.constant 0 : i32
    return %arg0, %c0_i32 : i32, i32
  }
  func.func @transform_1(%arg0: i32, %arg1: i32, %arg2: i32) -> (i32, i32) {
    %c0_i32 = arith.constant 0 : i32
    %c0_i32_0 = arith.constant 0 : i32
    return %c0_i32, %arg2 : i32, i32
  }
  func.func @transform_2(%arg0: i32, %arg1: i32, %arg2: i32) -> (i32, i32) {
    %c0_i32 = arith.constant 0 : i32
    %c0_i32_0 = arith.constant 0 : i32
    return %c0_i32, %arg2 : i32, i32
  }
  func.func @transform_3(%arg0: i32, %arg1: i32, %arg2: i32) -> (i32, i32) {
    %c0_i32 = arith.constant 0 : i32
    return %arg2, %arg1 : i32, i32
  }
  func.func @transform_4(%arg0: i32, %arg1: i32, %arg2: i32) -> (i32, i32) {
    %c0_i32 = arith.constant 0 : i32
    %c0_i32_0 = arith.constant 0 : i32
    return %c0_i32, %arg1 : i32, i32
  }
  func.func @transform_5(%arg0: i32, %arg1: i32, %arg2: i32) -> (i32, i32) {
    %c0_i32 = arith.constant 0 : i32
    return %arg0, %arg1 : i32, i32
  }
}

</mosaic_0001>

<llo_original>
// kernel: tpu_custom_call.1
$region0: #{tpu_custom_call.1}
  #allocation0 [shape = 'u32[]', space=smem, size = 0x4, offset = 0x4, fixed_abs, tag = 'smem constant byte address 0x4 - core index']
  #allocation1 [shape = 'u32[72,128]{1,0:T(1,128)}', space=vmem, size = 0x9000, scoped, tag = 'internal scratch']
  %s0 = inlined_call_operand.hbm [shape: f32[16,128], index: 0, kind: input, shape index: {}]
  %s1 = inlined_call_operand.hbm [shape: f32[128,128], index: 1, kind: input, shape index: {}]
  %s2 = inlined_call_operand.vmem [shape: f32[1,128], index: 2, kind: input, shape index: {}]
  %s3 = inlined_call_operand.hbm [shape: f32[128,128], index: 3, kind: input, shape index: {}]
  %s4 = inlined_call_operand.vmem [shape: f32[1,128], index: 4, kind: input, shape index: {}]
  %s5 = inlined_call_operand.hbm [shape: f32[16,128], index: 5, kind: output, shape index: {}]
  %s6 = sld [smem:[#allocation0]]
  $region73: #{tpu_custom_call.1} parent=0
    _
  %s8 = ssub.s32 1, %s6
  %s9 = scalar_select 0, %s8, %s6
  $region1: #{tpu_custom_call.1} parent=0
    #allocation2 [shape = 'u8[8192]{0}', space=vmem, size = 0x2000, scoped, tag = 'input window, operand 0']
    #allocation3 [shape = 's32[2]{0}', space=sflag, size = 0x8, scoped, tag = 'scoped memory for tpu_custom_call.1']
    #allocation4 [shape = 's32[2]{0}', space=sflag, size = 0x8, scoped, tag = 'scoped memory for tpu_custom_call.1']
    #allocation5 [shape = 'u8[65536]{0}', space=vmem, size = 0x10000, scoped, tag = 'input window, operand 1, single buffered']
    #allocation6 [shape = 's32[1]{0}', space=sflag, size = 0x4, scoped, tag = 'scoped memory for tpu_custom_call.1']
    #allocation7 [shape = 'u8[65536]{0}', space=vmem, size = 0x10000, scoped, tag = 'input window, operand 3, single buffered']
    #allocation8 [shape = 'u8[8192]{0}', space=vmem, size = 0x2000, scoped, tag = 'output window, operand 0']
    %10 = vsyncpa [#allocation3], 0
    %s11 = scalar_lea.sflag [#allocation3], 1
    %12 = vsyncpa %s11, 0
    %13 = vsyncpa [#allocation6], 0
    %14 = vsyncpa [#allocation4], 0
    %s15 = scalar_lea.sflag [#allocation4], 1
    %16 = vsyncpa %s15, 0
    loop: start=0, step=1, limit=4
    $region2: #{tpu_custom_call.1} parent=1 // loop_pre_header
      _
    $region3: #{tpu_custom_call.1} parent=1 // loop_header
      %s18 = sphi 0, %s22
      %p19 = scmp.ge.s32.totalorder %s18, 4
      %s25 = sphi 0, %s44
      %s26 = sphi 0, %s40
      %s27 = sphi 0, %s36
      %s28 = sphi 0, %s25
      %s29 = sphi 0, %s26
      %s30 = sphi 0, %s27
      %s31 = sphi 0, %s28
      %s32 = sphi 0, %s29
      %s33 = sphi 0, %s30
      %s47 = sphi 0, %s49
      %s50 = sphi 0, %s47
      %s51 = sphi 0, %s50
      %s67 = sphi 0, %s51
      %s73 = sphi 0, %s75
      %s76 = sphi 0, %s73
      %s77 = sphi 0, %s76
      %s93 = sphi 0, %s77
      %s99 = sphi 0, %s101
      %s102 = sphi 0, %s99
      %s103 = sphi 0, %s102
      %s119 = sphi 0, %s103
      %s127 = sphi 0, %s129
      %s130 = sphi 0, %s127
      %s131 = sphi 0, %s130
      %s147 = sphi 0, %s131
      %s153 = sphi 0, %s155
      %s156 = sphi 0, %s153
      %s157 = sphi 0, %s156
      %s173 = sphi 0, %s157
      %s181 = sphi 0, %s183
      %s184 = sphi 0, %s181
      %s185 = sphi 0, %s184
      %s201 = sphi 0, %s185
    $region4: #{tpu_custom_call.1} parent=1 // loop_header_branch
      %21 = sbr.rel (%p19) target = $region8
    $region5: #{tpu_custom_call.1} parent=1 // loop_body
      %s23 = ssub.s32 %s18, 1
      %s24 = ssub.s32 %s18, 2
      %s34 = sadd.s32 1, %s27
      %p35 = scmp.ge.s32.totalorder %s34, 1
      %s36 = scalar_select %p35, 0, %s34
      %s37 = sadd.s32 1, %s26
      %s38 = scalar_select %p35, %s37, %s26
      %p39 = scmp.ge.s32.totalorder %s38, 1
      %s40 = scalar_select %p39, 0, %s38
      %s41 = sadd.s32 1, %s25
      %s42 = scalar_select %p39, %s41, %s25
      %p43 = scmp.ge.s32.totalorder %s42, 2
      %s44 = scalar_select %p43, 0, %s42
      %s45 = ssub.s32 %s25, %s44
      %p46 = scmp.eq.s32.totalorder %s45, 0
      %s48 = sadd.s32 %s47, 1
      %s49 = scalar_select %p46, %s47, %s48
      %p52 = pneg %p46
      %p53 = scmp.eq.s32.totalorder %s18, 1
      %p54 = por %p52, %p53
      %p55 = scmp.ne.s32.totalorder %s47, %s50
      %p56 = scmp.eq.s32.totalorder %s18, 0
      %p57 = por %p55, %p56
      %p58 = scmp.ne.s32.totalorder %s47, %s50
      %p59 = scmp.eq.s32.totalorder %s23, 1
      %p60 = por %p58, %p59
      %p61 = scmp.ne.s32.totalorder %s50, %s51
      %p62 = scmp.eq.s32.totalorder %s23, 0
      %p63 = por %p61, %p62
      %p64 = scmp.ne.s32.totalorder %s50, %s51
      %p65 = scmp.eq.s32.totalorder %s24, 1
      %p66 = por %p64, %p65
      %p68 = scmp.ne.s32.totalorder %s51, %s67
      %p69 = scmp.eq.s32.totalorder %s24, 0
      %p70 = por %p68, %p69
      %s71 = ssub.s32 %s27, %s36
      %p72 = scmp.eq.s32.totalorder %s71, 0
      %s74 = sadd.s32 %s73, 1
      %s75 = scalar_select %p72, %s73, %s74
      %p78 = pneg %p72
      %p79 = scmp.eq.s32.totalorder %s18, 1
      %p80 = por %p78, %p79
      %p81 = scmp.ne.s32.totalorder %s73, %s76
      %p82 = scmp.eq.s32.totalorder %s18, 0
      %p83 = por %p81, %p82
      %p84 = scmp.ne.s32.totalorder %s73, %s76
      %p85 = scmp.eq.s32.totalorder %s23, 1
      %p86 = por %p84, %p85
      %p87 = scmp.ne.s32.totalorder %s76, %s77
      %p88 = scmp.eq.s32.totalorder %s23, 0
      %p89 = por %p87, %p88
      %p90 = scmp.ne.s32.totalorder %s76, %s77
      %p91 = scmp.eq.s32.totalorder %s24, 1
      %p92 = por %p90, %p91
      %p94 = scmp.ne.s32.totalorder %s77, %s93
      %p95 = scmp.eq.s32.totalorder %s24, 0
      %p96 = por %p94, %p95
      %s97 = ssub.s32 %s27, %s36
      %p98 = scmp.eq.s32.totalorder %s97, 0
      %s100 = sadd.s32 %s99, 1
      %s101 = scalar_select %p98, %s99, %s100
      %p104 = pneg %p98
      %p105 = scmp.eq.s32.totalorder %s18, 1
      %p106 = por %p104, %p105
      %p107 = scmp.ne.s32.totalorder %s99, %s102
      %p108 = scmp.eq.s32.totalorder %s18, 0
      %p109 = por %p107, %p108
      %p110 = scmp.ne.s32.totalorder %s99, %s102
      %p111 = scmp.eq.s32.totalorder %s23, 1
      %p112 = por %p110, %p111
      %p113 = scmp.ne.s32.totalorder %s102, %s103
      %p114 = scmp.eq.s32.totalorder %s23, 0
      %p115 = por %p113, %p114
      %p116 = scmp.ne.s32.totalorder %s102, %s103
      %p117 = scmp.eq.s32.totalorder %s24, 1
      %p118 = por %p116, %p117
      %p120 = scmp.ne.s32.totalorder %s103, %s119
      %p121 = scmp.eq.s32.totalorder %s24, 0
      %p122 = por %p120, %p121
      %s123 = ssub.s32 %s27, %s36
      %s124 = ssub.s32 %s26, %s40
      %s125 = sor.u32 %s123, %s124
      %p126 = scmp.eq.s32.totalorder %s125, 0
      %s128 = sadd.s32 %s127, 1
      %s129 = scalar_select %p126, %s127, %s128
      %p132 = pneg %p126
      %p133 = scmp.eq.s32.totalorder %s18, 1
      %p134 = por %p132, %p133
      %p135 = scmp.ne.s32.totalorder %s127, %s130
      %p136 = scmp.eq.s32.totalorder %s18, 0
      %p137 = por %p135, %p136
      %p138 = scmp.ne.s32.totalorder %s127, %s130
      %p139 = scmp.eq.s32.totalorder %s23, 1
      %p140 = por %p138, %p139
      %p141 = scmp.ne.s32.totalorder %s130, %s131
      %p142 = scmp.eq.s32.totalorder %s23, 0
      %p143 = por %p141, %p142
      %p144 = scmp.ne.s32.totalorder %s130, %s131
      %p145 = scmp.eq.s32.totalorder %s24, 1
      %p146 = por %p144, %p145
      %p148 = scmp.ne.s32.totalorder %s131, %s147
      %p149 = scmp.eq.s32.totalorder %s24, 0
      %p150 = por %p148, %p149
      %s151 = ssub.s32 %s26, %s40
      %p152 = scmp.eq.s32.totalorder %s151, 0
      %s154 = sadd.s32 %s153, 1
      %s155 = scalar_select %p152, %s153, %s154
      %p158 = pneg %p152
      %p159 = scmp.eq.s32.totalorder %s18, 1
      %p160 = por %p158, %p159
      %p161 = scmp.ne.s32.totalorder %s153, %s156
      %p162 = scmp.eq.s32.totalorder %s18, 0
      %p163 = por %p161, %p162
      %p164 = scmp.ne.s32.totalorder %s153, %s156
      %p165 = scmp.eq.s32.totalorder %s23, 1
      %p166 = por %p164, %p165
      %p167 = scmp.ne.s32.totalorder %s156, %s157
      %p168 = scmp.eq.s32.totalorder %s23, 0
      %p169 = por %p167, %p168
      %p170 = scmp.ne.s32.totalorder %s156, %s157
      %p171 = scmp.eq.s32.totalorder %s24, 1
      %p172 = por %p170, %p171
      %p174 = scmp.ne.s32.totalorder %s157, %s173
      %p175 = scmp.eq.s32.totalorder %s24, 0
      %p176 = por %p174, %p175
      %s177 = ssub.s32 %s25, %s44
      %s178 = ssub.s32 %s26, %s40
      %s179 = sor.u32 %s177, %s178
      %p180 = scmp.eq.s32.totalorder %s179, 0
      %s182 = sadd.s32 %s181, 1
      %s183 = scalar_select %p180, %s181, %s182
      %p186 = pneg %p180
      %p187 = scmp.eq.s32.totalorder %s18, 1
      %p188 = por %p186, %p187
      %p189 = scmp.ne.s32.totalorder %s181, %s184
      %p190 = scmp.eq.s32.totalorder %s18, 0
      %p191 = por %p189, %p190
      %p192 = scmp.ne.s32.totalorder %s181, %s184
      %p193 = scmp.eq.s32.totalorder %s23, 1
      %p194 = por %p192, %p193
      %p195 = scmp.ne.s32.totalorder %s184, %s185
      %p196 = scmp.eq.s32.totalorder %s23, 0
      %p197 = por %p195, %p196
      %p198 = scmp.ne.s32.totalorder %s184, %s185
      %p199 = scmp.eq.s32.totalorder %s24, 1
      %p200 = por %p198, %p199
      %p202 = scmp.ne.s32.totalorder %s185, %s201
      %p203 = scmp.eq.s32.totalorder %s24, 0
      %p204 = por %p202, %p203
      %p205 = scmp.le.s32.totalorder 1, %s18
      %p206 = scmp.lt.s32.totalorder %s18, 3
      %p207 = pnand %p205, %p206
      %p208 = pneg %p207
      // Predicated region
      $region9: #{tpu_custom_call.1} parent=5 // pred_check
        _
      $region10: #{tpu_custom_call.1} parent=5 // pred_check_branch
        %210 = sbr.rel (%p207) target = $region12
      $region11: #{tpu_custom_call.1} parent=5 // pred_region
        %s211 = ssub.s32 %s18, 1
        // Predicated region
        $region13: #{tpu_custom_call.1} parent=11 // pred_check
          %p212 = pneg %p89
        $region14: #{tpu_custom_call.1} parent=11 // pred_check_branch
          %214 = sbr.rel (%p212) target = $region16
        $region15: #{tpu_custom_call.1} parent=11 // pred_region
          %216 = vsyncadd [#allocation6], 0
          %s217 = smul.addr %s30, 8
          %s218 = scalar_lea.hbm %s1, %s217
          %s219 = sshll.u32 %s218, 4
          %s220 = int_to_ptr.hbm [resolvable:$true] %s219
          %s221 = sshll.u32 [#allocation5], 4
          %s222 = int_to_ptr.vmem [resolvable:$true] %s221
          %227 = dma.hbm_to_vmem [thread:$0]  %s220, 2048, %s222, [#allocation6], 128, 128, 8
        $region16: #{tpu_custom_call.1} parent=11 // pred_fallthru
          _
        // Predicated region
        $region17: #{tpu_custom_call.1} parent=11 // pred_check
          %p228 = pneg %p115
        $region18: #{tpu_custom_call.1} parent=11 // pred_check_branch
          %230 = sbr.rel (%p228) target = $region20
        $region19: #{tpu_custom_call.1} parent=11 // pred_region
          %p231 = scmp.lt.s32.totalorder %s30, 0
          %s232 = scalar_select %p231, %s30, 0
          %s233 = scalar_lea.vmem %s2, %s232
        $region20: #{tpu_custom_call.1} parent=11 // pred_fallthru
          _
        // Predicated region
        $region21: #{tpu_custom_call.1} parent=11 // pred_check
          %p234 = pneg %p143
        $region22: #{tpu_custom_call.1} parent=11 // pred_check_branch
          %236 = sbr.rel (%p234) target = $region24
        $region23: #{tpu_custom_call.1} parent=11 // pred_region
          %s237 = smul.u32 16, %s30
          %239 = vsyncadd [#allocation6], 0
          %s240 = sadd.s32 %s29, %s237
          %s241 = smul.addr %s240, 8
          %s242 = scalar_lea.hbm %s3, %s241
          %s243 = sshll.u32 %s242, 4
          %s244 = int_to_ptr.hbm [resolvable:$true] %s243
          %s245 = sshll.u32 [#allocation7], 4
          %s246 = int_to_ptr.vmem [resolvable:$true] %s245
          %251 = dma.hbm_to_vmem [thread:$0]  %s244, 2048, %s246, [#allocation6], 128, 128, 8
        $region24: #{tpu_custom_call.1} parent=11 // pred_fallthru
          _
        // Predicated region
        $region25: #{tpu_custom_call.1} parent=11 // pred_check
          %p252 = pneg %p169
        $region26: #{tpu_custom_call.1} parent=11 // pred_check_branch
          %254 = sbr.rel (%p252) target = $region28
        $region27: #{tpu_custom_call.1} parent=11 // pred_region
          %p255 = scmp.lt.s32.totalorder %s29, 0
          %s256 = scalar_select %p255, %s29, 0
          %s257 = scalar_lea.vmem %s4, %s256
        $region28: #{tpu_custom_call.1} parent=11 // pred_fallthru
          _
      $region12: #{tpu_custom_call.1} parent=5 // pred_fallthru
        _
      %p258 = scmp.lt.s32.totalorder %s18, 2
      // Predicated region
      $region29: #{tpu_custom_call.1} parent=5 // pred_check
        %p259 = pneg %p258
      $region30: #{tpu_custom_call.1} parent=5 // pred_check_branch
        %261 = sbr.rel (%p259) target = $region32
      $region31: #{tpu_custom_call.1} parent=5 // pred_region
        // Predicated region
        $region33: #{tpu_custom_call.1} parent=31 // pred_check
          %p262 = pneg %p57
        $region34: #{tpu_custom_call.1} parent=31 // pred_check_branch
          %264 = sbr.rel (%p262) target = $region36
        $region35: #{tpu_custom_call.1} parent=31 // pred_region
          %s265 = sand.u32 %s47, 1
          %s266 = scalar_lea.sflag [#allocation3], %s265
          %s267 = sand.u32 %s47, 1
          %s268 = smul.addr %s267, 8
          %s269 = scalar_lea.vmem [#allocation2], %s268
          %271 = vsyncadd %s266, 0
          %s272 = smul.addr %s25, 8
          %s273 = scalar_lea.hbm %s0, %s272
          %s275 = sshll.u32 %s273, 4
          %s276 = int_to_ptr.hbm [resolvable:$true] %s275
          %s277 = sshll.u32 %s269, 4
          %s278 = int_to_ptr.vmem [resolvable:$true] %s277
          %280 = dma.hbm_to_vmem [thread:$0]  %s276, 128, %s278, %s266
        $region36: #{tpu_custom_call.1} parent=31 // pred_fallthru
          _
      $region32: #{tpu_custom_call.1} parent=5 // pred_fallthru
        _
      %p281 = scmp.le.s32.totalorder 1, %s18
      %p282 = scmp.lt.s32.totalorder %s18, 3
      %p283 = pnand %p281, %p282
      %p284 = pneg %p283
      // Predicated region
      $region37: #{tpu_custom_call.1} parent=5 // pred_check
        _
      $region38: #{tpu_custom_call.1} parent=5 // pred_check_branch
        %286 = sbr.rel (%p283) target = $region40
      $region39: #{tpu_custom_call.1} parent=5 // pred_region
        %s287 = ssub.s32 %s18, 1
        %s288 = sand.u32 %s50, 1
        %s289 = scalar_lea.sflag [#allocation3], %s288
        %s290 = sand.u32 %s50, 1
        %s291 = smul.addr %s290, 8
        %s292 = scalar_lea.vmem [#allocation2], %s291
        // Predicated region
        $region41: #{tpu_custom_call.1} parent=39 // pred_check
          %p293 = pneg %p63
        $region42: #{tpu_custom_call.1} parent=39 // pred_check_branch
          %295 = sbr.rel (%p293) target = $region44
        $region43: #{tpu_custom_call.1} parent=39 // pred_region
          %297 = dma.done %s289, 128
        $region44: #{tpu_custom_call.1} parent=39 // pred_fallthru
          _
        // Predicated region
        $region45: #{tpu_custom_call.1} parent=39 // pred_check
          %p298 = pneg %p89
        $region46: #{tpu_custom_call.1} parent=39 // pred_check_branch
          %300 = sbr.rel (%p298) target = $region48
        $region47: #{tpu_custom_call.1} parent=39 // pred_region
          %302 = dma.done [#allocation6], 2048
        $region48: #{tpu_custom_call.1} parent=39 // pred_fallthru
          _
        // Predicated region
        $region49: #{tpu_custom_call.1} parent=39 // pred_check
          %p303 = pneg %p143
        $region50: #{tpu_custom_call.1} parent=39 // pred_check_branch
          %305 = sbr.rel (%p303) target = $region52
        $region51: #{tpu_custom_call.1} parent=39 // pred_region
          %307 = dma.done [#allocation6], 2048
        $region52: #{tpu_custom_call.1} parent=39 // pred_fallthru
          _
        %s308 = sand.u32 %s50, 1
        %s309 = scalar_lea.sflag [#allocation3], %s308
        %s310 = sand.u32 %s50, 1
        %s311 = smul.addr %s310, 8
        %s312 = scalar_lea.vmem [#allocation2], %s311
        %p313 = pneg %p63
        %p314 = pneg %p60
        %p315 = pneg %p89
        %p316 = pneg %p86
        %p317 = scmp.lt.s32.totalorder %s30, 0
        %s318 = scalar_select %p317, %s30, 0
        %s319 = scalar_lea.vmem %s2, %s318
        %p320 = pneg %p115
        %p321 = pneg %p112
        %p322 = pneg %p143
        %p323 = pneg %p140
        %p324 = scmp.lt.s32.totalorder %s29, 0
        %s325 = scalar_select %p324, %s29, 0
        %s326 = scalar_lea.vmem %s4, %s325
        %p327 = pneg %p169
        %p328 = pneg %p166
        %p329 = pneg %p197
        %p330 = pneg %p194
        %s331 = sand.u32 %s184, 1
        %s332 = scalar_lea.sflag [#allocation4], %s331
        %s333 = sand.u32 %s184, 1
        %s334 = smul.addr %s333, 8
        %s335 = scalar_lea.vmem [#allocation8], %s334
        %p336 = scmp.lt.s32.totalorder %s30, 0
        %s337 = scalar_select %p336, %s30, 0
        %s338 = scalar_lea.vmem %s2, %s337
        %s339 = smul.u32 16, %s30
        %p340 = scmp.lt.s32.totalorder %s29, 0
        %s341 = scalar_select %p340, %s29, 0
        %s342 = scalar_lea.vmem %s4, %s341
        %p343 = scmp.eq.s32.totalorder %s30, 0
        // Predicated region
        $region53: #{tpu_custom_call.1} parent=39 // pred_check
          %p344 = pneg %p343
        $region54: #{tpu_custom_call.1} parent=39 // pred_check_branch
          %346 = sbr.rel (%p344) target = $region56
        $region55: #{tpu_custom_call.1} parent=39 // pred_region
          %347 = vst [vmem:[%s335] sm:$0xff] 0.0
        $region56: #{tpu_custom_call.1} parent=39 // pred_fallthru
          _
        %v348 = vld [vmem:[%s292] sm:$0xff]
        %v349 = vld [vmem:[#allocation5] sm:$0xff]
        %v350 = vld [vmem:[#allocation5 + $0x8] sm:$0xff]
        %v351 = vld [vmem:[#allocation5 + $0x10] sm:$0xff]
        %v352 = vld [vmem:[#allocation5 + $0x18] sm:$0xff]
        %v353 = vld [vmem:[#allocation5 + $0x20] sm:$0xff]
        %v354 = vld [vmem:[#allocation5 + $0x28] sm:$0xff]
        %v355 = vld [vmem:[#allocation5 + $0x30] sm:$0xff]
        %v356 = vld [vmem:[#allocation5 + $0x38] sm:$0xff]
        %v357 = vld [vmem:[#allocation5 + $0x40] sm:$0xff]
        %v358 = vld [vmem:[#allocation5 + $0x48] sm:$0xff]
        %v359 = vld [vmem:[#allocation5 + $0x50] sm:$0xff]
        %v360 = vld [vmem:[#allocation5 + $0x58] sm:$0xff]
        %v361 = vld [vmem:[#allocation5 + $0x60] sm:$0xff]
        %v362 = vld [vmem:[#allocation5 + $0x68] sm:$0xff]
        %v363 = vld [vmem:[#allocation5 + $0x70] sm:$0xff]
        %v364 = vld [vmem:[#allocation5 + $0x78] sm:$0xff]
        %v365 = vld [vmem:[%s338] sm:$0x1]
        %v367 = vperm.slane %v365, 0
        %369 = vmatpush.msra.mxu0 %v364
        %370 = vmatpush.msra.mxu0 %v363
        %371 = vmatpush.msra.mxu0 %v362
        %372 = vmatpush.msra.mxu0 %v361
        %373 = vmatpush.msra.mxu0 %v360
        %374 = vmatpush.msra.mxu0 %v359
        %375 = vmatpush.msra.mxu0 %v358
        %376 = vmatpush.msra.mxu0 %v357
        %377 = vmatpush.msra.mxu0 %v356
        %378 = vmatpush.msra.mxu0 %v355
        %379 = vmatpush.msra.mxu0 %v354
        %380 = vmatpush.msra.mxu0 %v353
        %381 = vmatpush.msra.mxu0 %v352
        %382 = vmatpush.msra.mxu0 %v351
        %383 = vmatpush.msra.mxu0 %v350
        %384 = vmatpush.msra.mxu0 %v349
        %385 = vmatmul.f32.gmra.mxu0 %v348
        %v386 = vpop.f32.mrf.mxu0
        %v387 = vadd.f32 %v367, %v386
        %388 = vdwg.mxu0
        %v389 = vmul.f32 %v387, 0.5
        %v390 = vmul.f32 %v387, 0.70710677
        %v391 = vmul.f32 %v390, %v390
        %v392 = vmin.f32 16.0, %v391
        %v393 = vmul.f32 %v392, 2.1237322e-06
        %v394 = vadd.f32 %v393, 0.00028619796
        %v395 = vmul.f32 %v392, %v394
        %v396 = vadd.f32 %v395, 0.0036580483
        %v397 = vmul.f32 %v392, %v396
        %v398 = vadd.f32 %v397, 0.05243302
        %v399 = vmul.f32 %v392, %v398
        %v400 = vadd.f32 %v399, 0.18741608
        %v401 = vmul.f32 %v392, %v400
        %v402 = vadd.f32 %v401, 1.1283791
        %v403 = vmul.f32 %v390, %v402
        %v404 = vmul.f32 %v392, 3.8918573e-05
        %v405 = vadd.f32 %v404, 0.001143296
        %v406 = vmul.f32 %v392, %v405
        %v407 = vadd.f32 %v406, 0.014752088
        %v408 = vmul.f32 %v392, %v407
        %v409 = vadd.f32 %v408, 0.112945676
        %v410 = vmul.f32 %v392, %v409
        %v411 = vadd.f32 %v410, 0.4994258
        %v412 = vmul.f32 %v392, %v411
        %v413 = vadd.f32 %v412, 1.0
        %v414 = vrcp.pop %v413
        %v415 = vmul.f32 %v413, %v414
        %v416 = vsub.f32 1.0, %v415
        %v417 = vmul.f32 %v414, %v416
        %v418 = vadd.f32 %v414, %v417
        %vm419 = vweird.f32 %v413
        %vm420 = vweird.f32 %v414
        %vm421 = vmor %vm419, %vm420
        %v422 = vsel %vm421, %v414, %v418
        %v423 = vand.u32 2147483647, %v413
        %vm424 = vcmp.eq.f32.partialorder %v423, 8.507059e+37
        %v425 = vand.u32 %v413, 2147483648
        %v426 = vor.u32 1.1754944e-38, %v425
        %v427 = vsel %vm424, %v426, %v422
        %v428 = vmul.f32 %v403, %v427
        %v429 = vmin.f32 %v428, 1.0
        %v430 = vmax.f32 %v429, -1.0
        %v431 = vadd.f32 %v430, 1.0
        %v432 = vmul.f32 %v389, %v431
        %v433 = vld [vmem:[%s335] sm:$0xff]
        %v434 = vld [vmem:[#allocation7] sm:$0xff]
        %v435 = vld [vmem:[#allocation7 + $0x8] sm:$0xff]
        %v436 = vld [vmem:[#allocation7 + $0x10] sm:$0xff]
        %v437 = vld [vmem:[#allocation7 + $0x18] sm:$0xff]
        %v438 = vld [vmem:[#allocation7 + $0x20] sm:$0xff]
        %v439 = vld [vmem:[#allocation7 + $0x28] sm:$0xff]
        %v440 = vld [vmem:[#allocation7 + $0x30] sm:$0xff]
        %v441 = vld [vmem:[#allocation7 + $0x38] sm:$0xff]
        %v442 = vld [vmem:[#allocation7 + $0x40] sm:$0xff]
        %v443 = vld [vmem:[#allocation7 + $0x48] sm:$0xff]
        %v444 = vld [vmem:[#allocation7 + $0x50] sm:$0xff]
        %v445 = vld [vmem:[#allocation7 + $0x58] sm:$0xff]
        %v446 = vld [vmem:[#allocation7 + $0x60] sm:$0xff]
        %v447 = vld [vmem:[#allocation7 + $0x68] sm:$0xff]
        %v448 = vld [vmem:[#allocation7 + $0x70] sm:$0xff]
        %v449 = vld [vmem:[#allocation7 + $0x78] sm:$0xff]
        %450 = vmatpush.msra.mxu0 %v449
        %451 = vmatpush.msra.mxu0 %v448
        %452 = vmatpush.msra.mxu0 %v447
        %453 = vmatpush.msra.mxu0 %v446
        %454 = vmatpush.msra.mxu0 %v445
        %455 = vmatpush.msra.mxu0 %v444
        %456 = vmatpush.msra.mxu0 %v443
        %457 = vmatpush.msra.mxu0 %v442
        %458 = vmatpush.msra.mxu0 %v441
        %459 = vmatpush.msra.mxu0 %v440
        %460 = vmatpush.msra.mxu0 %v439
        %461 = vmatpush.msra.mxu0 %v438
        %462 = vmatpush.msra.mxu0 %v437
        %463 = vmatpush.msra.mxu0 %v436
        %464 = vmatpush.msra.mxu0 %v435
        %465 = vmatpush.msra.mxu0 %v434
        %466 = vmatmul.f32.gmra.mxu0 %v432
        %v467 = vpop.f32.mrf.mxu0
        %v468 = vadd.f32 0.0, %v467
        %469 = vdwg.mxu0
        %v470 = vadd.f32 %v433, %v468
        %471 = vst [vmem:[%s335] sm:$0xff] %v470
        // Predicated region
        $region57: #{tpu_custom_call.1} parent=39 // pred_check
          %p472 = pneg %p343
        $region58: #{tpu_custom_call.1} parent=39 // pred_check_branch
          %474 = sbr.rel (%p472) target = $region60
        $region59: #{tpu_custom_call.1} parent=39 // pred_region
          %v475 = vld [vmem:[%s335] sm:$0xff]
          %v476 = vld [vmem:[%s342] sm:$0x1]
          %v478 = vperm.slane %v476, 0
          %v480 = vadd.f32 %v475, %v478
          %481 = vst [vmem:[%s335] sm:$0xff] %v480
        $region60: #{tpu_custom_call.1} parent=39 // pred_fallthru
          _
        %s482 = sand.u32 %s184, 1
        %s483 = scalar_lea.sflag [#allocation4], %s482
        %s484 = sand.u32 %s184, 1
        %s485 = smul.addr %s484, 8
        %s486 = scalar_lea.vmem [#allocation8], %s485
        // Predicated region
        $region61: #{tpu_custom_call.1} parent=39 // pred_check
          %p487 = pneg %p194
        $region62: #{tpu_custom_call.1} parent=39 // pred_check_branch
          %489 = sbr.rel (%p487) target = $region64
        $region63: #{tpu_custom_call.1} parent=39 // pred_region
          %491 = vsyncadd %s483, 0
          %s492 = sadd.s32 %s29, %s28
          %s493 = smul.addr %s492, 8
          %s494 = scalar_lea.hbm %s5, %s493
          %s496 = sshll.u32 %s486, 4
          %s497 = int_to_ptr.vmem [resolvable:$true] %s496
          %s498 = sshll.u32 %s494, 4
          %s499 = int_to_ptr.hbm [resolvable:$true] %s498
          %501 = dma.vmem_to_hbm [thread:$0]  %s497, 128, %s499, %s483
        $region64: #{tpu_custom_call.1} parent=39 // pred_fallthru
          _
      $region40: #{tpu_custom_call.1} parent=5 // pred_fallthru
        _
      %p502 = scmp.le.s32.totalorder 2, %s18
      // Predicated region
      $region65: #{tpu_custom_call.1} parent=5 // pred_check
        %p503 = pneg %p502
      $region66: #{tpu_custom_call.1} parent=5 // pred_check_branch
        %505 = sbr.rel (%p503) target = $region68
      $region67: #{tpu_custom_call.1} parent=5 // pred_region
        %s506 = ssub.s32 %s18, 2
        // Predicated region
        $region69: #{tpu_custom_call.1} parent=67 // pred_check
          %p507 = pneg %p200
        $region70: #{tpu_custom_call.1} parent=67 // pred_check_branch
          %509 = sbr.rel (%p507) target = $region72
        $region71: #{tpu_custom_call.1} parent=67 // pred_region
          %s510 = sand.u32 %s185, 1
          %s511 = scalar_lea.sflag [#allocation4], %s510
          %s512 = sand.u32 %s185, 1
          %s513 = smul.addr %s512, 8
          %s514 = scalar_lea.vmem [#allocation8], %s513
          %516 = dma.done %s511, 128
        $region72: #{tpu_custom_call.1} parent=67 // pred_fallthru
          _
      $region68: #{tpu_custom_call.1} parent=5 // pred_fallthru
        _
    $region6: #{tpu_custom_call.1} parent=1 // loop_footer
      %s22 = sadd.s32 1, %s18
    $region7: #{tpu_custom_call.1} parent=1 // loop_footer_branch
      %17 = sbr.rel target = $region3
    $region8: #{tpu_custom_call.1} parent=1 // loop_exit
      _
    %517 = vsyncpa [#allocation3], 1
    %s518 = scalar_lea.sflag [#allocation3], 1
    %519 = vsyncpa %s518, 1
    %520 = vsyncpa [#allocation6], 1
    %521 = vsyncpa [#allocation4], 1
    %s522 = scalar_lea.sflag [#allocation4], 1
    %523 = vsyncpa %s522, 1

</llo_original>
